<compile_context>
chip_gen: v7x
topology: tpu7x:2x2x1
jax: 0.10.0
libtpu: 0.0.40
codegen_flags: <defaults>
</compile_context>

<pallas_src>
import jax
import jax.numpy as jnp
from jax.experimental import pallas as pl
from jax.experimental.pallas import tpu as pltpu


# ------------------------------- small helpers ------------------------------ #

def _round_up(a, b):
    return ((a + b - 1) // b) * b


def _ppad(P):
    # +1 column for the constant-1 "bias" row, rounded up to the bf16 K packing granule.
    return _round_up(P + 1, 16)


def _auto_config():
    """Per-generation defaults: tile size (amortize ~0.35us/step pipeline overhead),
    scoped-VMEM limit, and whether the bias/ReLU epilogue runs in bf16 (needs a bf16 VPU,
    i.e. v6e/v7x; on v5e/v4 bf16 elementwise is emulated and would regress)."""
    try:
        kind = jax.devices()[0].device_kind.lower()
    except Exception:
        kind = ""
    if "v5 lite" in kind or "v5e" in kind:
        return {"tile_n": 2048, "vmem_limit": 64 << 20, "bf16_epilogue": False}
    if "v6" in kind or "trillium" in kind:
        return {"tile_n": 8192, "vmem_limit": 96 << 20, "bf16_epilogue": True}
    if "v7" in kind:
        # 64 MiB physical VMEM per TC -> cap both the tile and the scoped limit.
        return {"tile_n": 4096, "vmem_limit": 48 << 20, "bf16_epilogue": True}
    if "v4" in kind or "v5" in kind:
        return {"tile_n": 4096, "vmem_limit": 64 << 20, "bf16_epilogue": False}
    return {"tile_n": 4096, "vmem_limit": None, "bf16_epilogue": False}


# --------------------- shared kernel / mirrored-reference math -------------- #

def _mlp_math(x, wb, *, large, bf16_epilogue, p_rows):
    """Math shared by the kernel body and the mirrored JAX reference.

    x:  (din_pad, n) f32, rows = [penc(P) | 1.0 | zero-pad | xyz(3)].
    wb: flat weights/biases as produced by _flatten_params.
    Returns (1, n) f32 densities with the out-of-bounds mask applied.
    """
    # Mask first: only this (1, n) row stays live across the layer chain, not the f32 tile.
    oob = jnp.max(jnp.abs(x), axis=0, keepdims=True) > 1.0

    act_dt = jnp.bfloat16 if bf16_epilogue else jnp.float32
    p = x[:p_rows, :].astype(jnp.bfloat16)          # aligned prefix slice (incl. 1.0 row)

    def first(w):
        z = jnp.dot(w, p, preferred_element_type=jnp.float32)     # bias folded into w
        return jnp.maximum(z.astype(act_dt), 0.0)

    def layer(w, b, h):
        z = jnp.dot(w, h.astype(jnp.bfloat16), preferred_element_type=jnp.float32)
        return jnp.maximum(z.astype(act_dt) + b, 0.0)

    def last(w, b, h):
        z = jnp.dot(w, h.astype(jnp.bfloat16), preferred_element_type=jnp.float32) + b
        return jax.nn.sigmoid(z)                                    # (1, n) f32

    if not large:
        w1e, w2, b2, w3, b3, w4, b4 = wb
        h = first(w1e)
        h = layer(w2, b2, h)
        h = layer(w3, b3, h)
        d = last(w4, b4, h)
    else:
        (w1e, w2, b2, w3, b3, w4, b4, w5, b5,
         w6pe, w6h, w7, b7, w8, b8, w9, b9, w10, b10) = wb
        h = first(w1e)
        h = layer(w2, b2, h)
        h = layer(w3, b3, h)
        h = layer(w4, b4, h)
        h = layer(w5, b5, h)
        # layers_2[0] acts on concat([penc, h]); expressed as a split matmul with the
        # bias folded into the penc half's constant-1 column.
        g = (jnp.dot(w6pe, p, preferred_element_type=jnp.float32)
             + jnp.dot(w6h, h.astype(jnp.bfloat16), preferred_element_type=jnp.float32))
        g = jnp.maximum(g, 0.0).astype(act_dt)
        g = layer(w7, b7, g)
        g = layer(w8, b8, g)
        g = layer(w9, b9, g)
        d = last(w10, b10, g)

    return jnp.where(oob, 0.0, d)


def _make_kernel(large, bf16_epilogue, p_rows, n_wb):
    def kernel(x_ref, *refs):
        wb = [r[...] for r in refs[:n_wb]]
        out_ref = refs[n_wb]
        out_ref[...] = _mlp_math(x_ref[...], wb, large=large,
                                 bf16_epilogue=bf16_epilogue, p_rows=p_rows)
    return kernel


# --------------------------- parameter creation ----------------------------- #

def init_params(key, num_pos_enc, large, features=256):
    """Synthetic weights (PyTorch nn.Linear-style uniform init), stored in the
    PyTorch layout: W:(out, in), b:(out,)."""
    P = num_pos_enc * 2 * 3
    C = features

    def linear(k, fan_in, fan_out):
        k1, k2 = jax.random.split(k)
        bound = float(fan_in) ** -0.5
        W = jax.random.uniform(k1, (fan_out, fan_in), jnp.float32, -bound, bound)
        b = jax.random.uniform(k2, (fan_out,), jnp.float32, -bound, bound)
        return W, b

    if large:
        dims1 = [(P, C), (C, C), (C, C), (C, C), (C, C)]
        dims2 = [(P + C, C), (C, C), (C, C), (C, C), (C, 1)]
    else:
        dims1 = [(P, C), (C, C), (C, C), (C, 1)]
        dims2 = []

    keys = jax.random.split(key, len(dims1) + len(dims2))
    layers_1 = [linear(keys[i], fi, fo) for i, (fi, fo) in enumerate(dims1)]
    layers_2 = [linear(keys[len(dims1) + i], fi, fo) for i, (fi, fo) in enumerate(dims2)]
    return {"layers_1": layers_1, "layers_2": layers_2}


# ----------------------- wrapper-side data preparation ----------------------- #

def _flatten_params(params, large, P, P_pad, bf16_epilogue):
    """Weights -> bf16 resident MXU operands; hidden biases in the epilogue dtype
    (bf16 on v6e/v7x, f32 on v5e); final bias stays f32.  The first-layer (and
    concat-layer penc-half) bias is folded into the padded K columns: input row P is a
    constant 1.0, so column P of the folded weight carries the bias."""
    bias_dt = jnp.bfloat16 if bf16_epilogue else jnp.float32

    def col(b, dt):
        return b.reshape(-1, 1).astype(dt)

    def bf(W):
        return W.astype(jnp.bfloat16)

    def fold_first(W, b):
        # (C_out, P) -> (C_out, P_pad) = [W | b | 0...], matching input rows [penc|1|0...].
        C_out = W.shape[0]
        cols = [W, b.reshape(-1, 1)]
        extra = P_pad - P - 1
        if extra > 0:
            cols.append(jnp.zeros((C_out, extra), W.dtype))
        return jnp.concatenate(cols, axis=1).astype(jnp.bfloat16)

    l1 = params["layers_1"]
    if not large:
        (W1, b1), (W2, b2), (W3, b3), (W4, b4) = l1
        return [fold_first(W1, b1),
                bf(W2), col(b2, bias_dt), bf(W3), col(b3, bias_dt),
                bf(W4), col(b4, jnp.float32)]

    (W1, b1), (W2, b2), (W3, b3), (W4, b4), (W5, b5) = l1
    (W6, b6), (W7, b7), (W8, b8), (W9, b9), (W10, b10) = params["layers_2"]
    return [fold_first(W1, b1),
            bf(W2), col(b2, bias_dt), bf(W3), col(b3, bias_dt),
            bf(W4), col(b4, bias_dt), bf(W5), col(b5, bias_dt),
            fold_first(W6[:, :P], b6), bf(W6[:, P:]),
            bf(W7), col(b7, bias_dt), bf(W8), col(b8, bias_dt),
            bf(W9), col(b9, bias_dt),
            bf(W10), col(b10, jnp.float32)]


def _build_inputs(x, P_pad, scale):
    """Cheap JAX glue: per-sample step lengths + the feature-major kernel input."""
    bs, ns, din = x.shape
    P = din - 3
    N = bs * ns
    # distances[:, 0] = 1, distances[:, i>0] = ||xyz_i - xyz_{i-1}||_2 * scale
    diff = x[:, :-1, :3] - x[:, 1:, :3]
    dist = jnp.sqrt(jnp.sum(diff * diff, axis=2))[..., None] * scale
    distances = jnp.concatenate([jnp.ones((bs, 1, 1), x.dtype), dist], axis=1)

    # feature-major kernel input: rows = [penc | 1.0 (bias row) | zero-pad | xyz]
    x_flat = x.reshape(N, din)
    parts = [x_flat[:, 3:], jnp.ones((N, 1), x.dtype)]
    if P_pad - P - 1 > 0:
        parts.append(jnp.zeros((N, P_pad - P - 1), x.dtype))
    parts.append(x_flat[:, :3])
    # TODO(synk): this reorder+transpose is one fused XLA read+write pass over x in HBM;
    # an in-kernel XLU transpose of sample-major blocks would remove that pass but is a
    # riskier lowering path, so it stays wrapper-side for now.
    xT = jnp.concatenate(parts, axis=1).T          # (P_pad + 3, N)
    return xT, distances


# ------------------------------- forward ------------------------------------ #

def em_simulator_forward(x, params, large, scale=7.0,
                         tile_n=None, bf16_epilogue=None, vmem_limit_bytes=None):
    """Equivalent of EM_Simulator.forward(x, is_training=True,
    get_single_densities=False, tv_1d=False)."""
    # TODO(synk): only the default path (is_training=True, get_single_densities=False,
    # tv_1d=False) is exposed; the other flags are trivial JAX glue around the same
    # kernel densities.
    bs, ns, din = x.shape
    P = din - 3
    N = bs * ns
    C = params["layers_1"][0][0].shape[0]
    P_pad = _ppad(P)
    din_pad = P_pad + 3

    cfg = _auto_config()
    if tile_n is None:
        tile_n = cfg["tile_n"]
    if bf16_epilogue is None:
        bf16_epilogue = cfg["bf16_epilogue"]
    if vmem_limit_bytes is None:
        vmem_limit_bytes = cfg["vmem_limit"]

    xT, distances = _build_inputs(x, P_pad, scale)

    # ---- tile the sample (lane) axis: large tiles amortize per-step pipeline overhead;
    # keep >= 2 (and preferably an even number of) tiles so dimension_semantics shards
    # work evenly across v7x's 2 TensorCores; rebalance the tile to trim padding waste.
    n128 = _round_up(N, 128)
    tile = max(128, min((int(tile_n) // 128) * 128, n128))
    num_tiles = -(-n128 // tile)
    if num_tiles == 1:
        if n128 >= 256:
            num_tiles = 2
    elif num_tiles % 2:
        num_tiles += 1
    tile = max(128, _round_up(-(-n128 // num_tiles), 128))
    num_tiles = -(-n128 // tile)
    N_pad = num_tiles * tile
    if N_pad > N:
        xT = jnp.pad(xT, ((0, 0), (0, N_pad - N)))      # padded lanes sliced off below

    flat_wb = _flatten_params(params, large, P, P_pad, bf16_epilogue)
    kernel = _make_kernel(large, bf16_epilogue, P_pad, len(flat_wb))

    in_specs = [pl.BlockSpec((din_pad, tile), lambda i: (0, i))]
    for a in flat_wb:
        # whole weight/bias resident in VMEM (constant block index -> no re-DMA per step).
        in_specs.append(pl.BlockSpec(a.shape, lambda i: (0, 0)))

    if large:
        flops_per = 2 * (P_pad * C + 4 * C * C + (P_pad + C) * C + 3 * C * C + C)
    else:
        flops_per = 2 * (P_pad * C + 2 * C * C + C)
    w_bytes = sum(int(a.size) * a.dtype.itemsize for a in flat_wb)
    cost = pl.CostEstimate(
        flops=int(N_pad * flops_per),
        transcendentals=int(N_pad),                      # one sigmoid per sample
        bytes_accessed=int(din_pad * N_pad * 4 + w_bytes + N_pad * 4))

    cp_kwargs = dict(dimension_semantics=("parallel",))
    if vmem_limit_bytes is not None:
        cp_kwargs["vmem_limit_bytes"] = int(vmem_limit_bytes)

    dens = pl.pallas_call(
        kernel,
        out_shape=jax.ShapeDtypeStruct((num_tiles, tile), jnp.float32),
        grid_spec=pltpu.PrefetchScalarGridSpec(
            num_scalar_prefetch=0,
            grid=(num_tiles,),
            in_specs=in_specs,
            out_specs=pl.BlockSpec((1, tile), lambda i: (i, 0)),   # lane-dense output slab
        ),
        compiler_params=pltpu.CompilerParams(**cp_kwargs),
        cost_estimate=cost,
    )(xT, *flat_wb)

    # drop padded samples, then the cheap per-ray accumulation in plain JAX
    densities = dens.reshape(N_pad)[:N].reshape(bs, ns, 1)
    acc = jnp.sum(densities * distances, axis=1)         # (bs, 1)
    return jnp.exp(-acc)


# ------------------------------- references --------------------------------- #

def _mirrored_ref(x, params, large, scale, bf16_epilogue):
    """Runs the *exact* kernel math (same flat weights, same dtypes, same _mlp_math)
    in plain JAX -- tight check for the Pallas lowering itself."""
    bs, ns, din = x.shape
    P = din - 3
    N = bs * ns
    P_pad = _ppad(P)
    xT, distances = _build_inputs(x, P_pad, scale)
    flat_wb = _flatten_params(params, large, P, P_pad, bf16_epilogue)
    dens = _mlp_math(xT, flat_wb, large=large, bf16_epilogue=bf16_epilogue, p_rows=P_pad)
    densities = dens.reshape(N).reshape(bs, ns, 1)
    acc = jnp.sum(densities * distances, axis=1)
    return jnp.exp(-acc)


def _ref_forward_f32(x, params, large, scale=7.0):
    """The true f32 PyTorch module math (no bf16) -- looser check, validates that the
    bf16 weight/epilogue quantization is acceptable."""
    bs, ns, din = x.shape
    diff = x[:, :-1, :3] - x[:, 1:, :3]
    dist = jnp.sqrt(jnp.sum(diff * diff, axis=2))[..., None] * scale
    distances = jnp.concatenate([jnp.ones((bs, 1, 1), x.dtype), dist], axis=1)

    xf = x.reshape(bs * ns, din)
    p = xf[:, 3:]

    def lin(v, W, b):
        return v @ W.T + b

    l1 = params["layers_1"]
    h = p
    for (W, b) in l1[:-1]:
        h = jnp.maximum(lin(h, W, b), 0.0)
    if not large:
        W, b = l1[-1]
        d = jax.nn.sigmoid(lin(h, W, b))
    else:
        W, b = l1[-1]
        h = jnp.maximum(lin(h, W, b), 0.0)
        g = jnp.concatenate([p, h], axis=-1)
        l2 = params["layers_2"]
        for (W, b) in l2[:-1]:
            g = jnp.maximum(lin(g, W, b), 0.0)
        W, b = l2[-1]
        d = jax.nn.sigmoid(lin(g, W, b))

    oob = jnp.sum((xf > 1) | (xf < -1), axis=-1) >= 1
    d = jnp.where(oob, 0.0, jnp.squeeze(d, -1)).reshape(bs, ns, 1)
    return jnp.exp(-jnp.sum(d * distances, axis=1))


# ---------------------------------- main ------------------------------------ #

if __name__ == "__main__":
    num_pos_enc = 4                       # -> P = 24, input_size = 27
    features = 128                        # small "channels" for the test
    bs, ns = 2, 16                        # bs*ns = 32 samples
    P = num_pos_enc * 2 * 3
    din = 3 + P

    key = jax.random.PRNGKey(0)
    kx, kp_small, kp_large = jax.random.split(key, 3)
    # mostly in-bounds coordinates ...
    x = jax.random.uniform(kx, (bs, ns, din), jnp.float32, -0.35, 0.35)
    # ... plus a couple of deliberately out-of-bounds samples to exercise masking
    x = x.at[0, 3, 0].set(1.5)
    x = x.at[1, 7, 10].set(-1.25)

    for large, kp in ((False, kp_small), (True, kp_large)):
        params = init_params(kp, num_pos_enc, large, features)
        ref32 = _ref_forward_f32(x, params, large, scale=7.0)
        lr = -jnp.log(jnp.clip(ref32, 1e-30, None))

        for bf16_epilogue in (False, True):       # exercise both epilogue code paths
            out = em_simulator_forward(x, params, large, scale=7.0,
                                       bf16_epilogue=bf16_epilogue)
            out = jax.block_until_ready(out)
            assert out.shape == (bs, 1), out.shape

            mirr = _mirrored_ref(x, params, large, 7.0, bf16_epilogue)
            # Compare accumulated optical depth (log space): exp(-acc) spans many orders
            # of magnitude, so log space is the numerically fair comparison.
            la = -jnp.log(jnp.clip(out, 1e-30, None))
            lm = -jnp.log(jnp.clip(mirr, 1e-30, None))
            assert jnp.allclose(la, lm, rtol=2e-2, atol=2e-2), \
                ("mirrored", large, bf16_epilogue, out, mirr)
            # Against the true f32 module math: validates the bf16 quantization choice
            # with a correspondingly looser tolerance.
            assert jnp.allclose(la, lr, rtol=1.5e-1, atol=1.5e-1), \
                ("f32", large, bf16_epilogue, out, ref32)

    print("KERNEL_OK")
</pallas_src>

<mosaic_0001>
module attributes {stable_mosaic.version = 11 : i64} {
  func.func @kernel(%arg0: i32, %arg1: memref<35x128xf32, #tpu.memory_space<vmem>>, %arg2: memref<128x32xbf16, #tpu.memory_space<vmem>>, %arg3: memref<128x128xbf16, #tpu.memory_space<vmem>>, %arg4: memref<128x1xf32, #tpu.memory_space<vmem>>, %arg5: memref<128x128xbf16, #tpu.memory_space<vmem>>, %arg6: memref<128x1xf32, #tpu.memory_space<vmem>>, %arg7: memref<1x128xbf16, #tpu.memory_space<vmem>>, %arg8: memref<1x1xf32, #tpu.memory_space<vmem>>, %arg9: memref<1x128xf32, #tpu.memory_space<vmem>>) attributes {dimension_semantics = [#tpu.dimension_semantics<parallel>], iteration_bounds = array<i64: 1>, scalar_prefetch = 0 : i64, scratch_operands = 0 : i64, tpu.core_type = #tpu.core_type<tc>, window_params = [{transform_indices = @transform_0, window_bounds = array<i64: 35, 128>}, {pipeline_mode = #tpu.pipeline_mode<synchronous>, transform_indices = @transform_1, window_bounds = array<i64: 128, 32>}, {pipeline_mode = #tpu.pipeline_mode<synchronous>, transform_indices = @transform_2, window_bounds = array<i64: 128, 128>}, {pipeline_mode = #tpu.pipeline_mode<synchronous>, transform_indices = @transform_3, window_bounds = array<i64: 128, 1>}, {pipeline_mode = #tpu.pipeline_mode<synchronous>, transform_indices = @transform_4, window_bounds = array<i64: 128, 128>}, {pipeline_mode = #tpu.pipeline_mode<synchronous>, transform_indices = @transform_5, window_bounds = array<i64: 128, 1>}, {pipeline_mode = #tpu.pipeline_mode<synchronous>, transform_indices = @transform_6, window_bounds = array<i64: 1, 128>}, {pipeline_mode = #tpu.pipeline_mode<synchronous>, transform_indices = @transform_7, window_bounds = array<i64: 1, 1>}, {transform_indices = @transform_8, window_bounds = array<i64: 1, 128>}]} {
    %c0 = arith.constant 0 : index
    %c0_0 = arith.constant 0 : index
    %0 = vector.load %arg2[%c0, %c0_0] : memref<128x32xbf16, #tpu.memory_space<vmem>>, vector<128x32xbf16>
    %c0_1 = arith.constant 0 : index
    %c0_2 = arith.constant 0 : index
    %1 = vector.load %arg3[%c0_1, %c0_2] : memref<128x128xbf16, #tpu.memory_space<vmem>>, vector<128x128xbf16>
    %c0_3 = arith.constant 0 : index
    %c0_4 = arith.constant 0 : index
    %2 = vector.load %arg4[%c0_3, %c0_4] : memref<128x1xf32, #tpu.memory_space<vmem>>, vector<128x1xf32>
    %c0_5 = arith.constant 0 : index
    %c0_6 = arith.constant 0 : index
    %3 = vector.load %arg5[%c0_5, %c0_6] : memref<128x128xbf16, #tpu.memory_space<vmem>>, vector<128x128xbf16>
    %c0_7 = arith.constant 0 : index
    %c0_8 = arith.constant 0 : index
    %4 = vector.load %arg6[%c0_7, %c0_8] : memref<128x1xf32, #tpu.memory_space<vmem>>, vector<128x1xf32>
    %c0_9 = arith.constant 0 : index
    %c0_10 = arith.constant 0 : index
    %5 = vector.load %arg7[%c0_9, %c0_10] : memref<1x128xbf16, #tpu.memory_space<vmem>>, vector<1x128xbf16>
    %c0_11 = arith.constant 0 : index
    %c0_12 = arith.constant 0 : index
    %6 = vector.load %arg8[%c0_11, %c0_12] : memref<1x1xf32, #tpu.memory_space<vmem>>, vector<1x1xf32>
    %c0_13 = arith.constant 0 : index
    %c0_14 = arith.constant 0 : index
    %7 = vector.load %arg1[%c0_13, %c0_14] : memref<35x128xf32, #tpu.memory_space<vmem>>, vector<35x128xf32>
    %8 = math.absf %7 : vector<35x128xf32>
    %cst = arith.constant dense<0xFF800000> : vector<128xf32>
    %9 = vector.multi_reduction <maximumf>, %8, %cst [0] : vector<35x128xf32> to vector<128xf32>
    %10 = vector.shape_cast %9 : vector<128xf32> to vector<1x128xf32>
    %cst_15 = arith.constant 1.000000e+00 : f32
    %11 = vector.broadcast %cst_15 : f32 to vector<1x128xf32>
    %12 = arith.cmpf ogt, %10, %11 : vector<1x128xf32>
    %13 = vector.extract_strided_slice %7 {offsets = [0, 0], sizes = [32, 128], strides = [1, 1]} : vector<35x128xf32> to vector<32x128xf32>
    %14 = arith.truncf %13 : vector<32x128xf32> to vector<32x128xbf16>
    %cst_16 = arith.constant dense<0.000000e+00> : vector<128x128xf32>
    %15 = tpu.matmul %0, %14, %cst_16 {dimension_numbers = #tpu.dot_dimension_numbers<[1], [0], [0], [1], [0, 0, 1, 1], [], []>} : vector<128x32xbf16>, vector<32x128xbf16>, vector<128x128xf32> -> vector<128x128xf32>
    %cst_17 = arith.constant 0.000000e+00 : f32
    %16 = vector.broadcast %cst_17 : f32 to vector<128x128xf32>
    %17 = arith.maximumf %15, %16 : vector<128x128xf32>
    %18 = arith.truncf %17 : vector<128x128xf32> to vector<128x128xbf16>
    %cst_18 = arith.constant dense<0.000000e+00> : vector<128x128xf32>
    %19 = tpu.matmul %1, %18, %cst_18 {dimension_numbers = #tpu.dot_dimension_numbers<[1], [0], [0], [1], [0, 0, 1, 1], [], []>} : vector<128x128xbf16>, vector<128x128xbf16>, vector<128x128xf32> -> vector<128x128xf32>
    %20 = vector.broadcast %2 : vector<128x1xf32> to vector<128x128xf32>
    %21 = arith.addf %19, %20 : vector<128x128xf32>
    %cst_19 = arith.constant 0.000000e+00 : f32
    %22 = vector.broadcast %cst_19 : f32 to vector<128x128xf32>
    %23 = arith.maximumf %21, %22 : vector<128x128xf32>
    %24 = arith.truncf %23 : vector<128x128xf32> to vector<128x128xbf16>
    %cst_20 = arith.constant dense<0.000000e+00> : vector<128x128xf32>
    %25 = tpu.matmul %3, %24, %cst_20 {dimension_numbers = #tpu.dot_dimension_numbers<[1], [0], [0], [1], [0, 0, 1, 1], [], []>} : vector<128x128xbf16>, vector<128x128xbf16>, vector<128x128xf32> -> vector<128x128xf32>
    %26 = vector.broadcast %4 : vector<128x1xf32> to vector<128x128xf32>
    %27 = arith.addf %25, %26 : vector<128x128xf32>
    %cst_21 = arith.constant 0.000000e+00 : f32
    %28 = vector.broadcast %cst_21 : f32 to vector<128x128xf32>
    %29 = arith.maximumf %27, %28 : vector<128x128xf32>
    %30 = arith.truncf %29 : vector<128x128xf32> to vector<128x128xbf16>
    %cst_22 = arith.constant dense<0.000000e+00> : vector<1x128xf32>
    %31 = tpu.matmul %5, %30, %cst_22 {dimension_numbers = #tpu.dot_dimension_numbers<[1], [0], [0], [1], [0, 0, 1, 1], [], []>} : vector<1x128xbf16>, vector<128x128xbf16>, vector<1x128xf32> -> vector<1x128xf32>
    %32 = vector.broadcast %6 : vector<1x1xf32> to vector<1x128xf32>
    %33 = arith.addf %31, %32 : vector<1x128xf32>
    %34 = arith.negf %33 : vector<1x128xf32>
    %35 = math.exp %34 : vector<1x128xf32>
    %cst_23 = arith.constant 1.000000e+00 : f32
    %36 = vector.broadcast %cst_23 : f32 to vector<1x128xf32>
    %37 = arith.addf %36, %35 : vector<1x128xf32>
    %38 = arith.divf %36, %37 : vector<1x128xf32>
    %cst_24 = arith.constant 0.000000e+00 : f32
    %39 = vector.broadcast %cst_24 : f32 to vector<1x128xf32>
    %40 = arith.select %12, %39, %38 : vector<1x128xi1>, vector<1x128xf32>
    %c0_25 = arith.constant 0 : index
    %c0_26 = arith.constant 0 : index
    %41 = vector.load %arg9[%c0_25, %c0_26] : memref<1x128xf32, #tpu.memory_space<vmem>>, vector<1x128xf32>
    tpu.vector_store %arg9[%c0_25, %c0_26], %40 {strides = array<i32>} : memref<1x128xf32, #tpu.memory_space<vmem>>, vector<1x128xf32>,
    return
  }
  func.func @transform_0(%arg0: i32) -> (i32, i32) {
    %c0_i32 = arith.constant 0 : i32
    %c0_i32_0 = arith.constant 0 : i32
    return %c0_i32, %arg0 : i32, i32
  }
  func.func @transform_1(%arg0: i32) -> (i32, i32) {
    %c0_i32 = arith.constant 0 : i32
    %c0_i32_0 = arith.constant 0 : i32
    %c0_i32_1 = arith.constant 0 : i32
    return %c0_i32, %c0_i32_0 : i32, i32
  }
  func.func @transform_2(%arg0: i32) -> (i32, i32) {
    %c0_i32 = arith.constant 0 : i32
    %c0_i32_0 = arith.constant 0 : i32
    %c0_i32_1 = arith.constant 0 : i32
    return %c0_i32, %c0_i32_0 : i32, i32
  }
  func.func @transform_3(%arg0: i32) -> (i32, i32) {
    %c0_i32 = arith.constant 0 : i32
    %c0_i32_0 = arith.constant 0 : i32
    %c0_i32_1 = arith.constant 0 : i32
    return %c0_i32, %c0_i32_0 : i32, i32
  }
  func.func @transform_4(%arg0: i32) -> (i32, i32) {
    %c0_i32 = arith.constant 0 : i32
    %c0_i32_0 = arith.constant 0 : i32
    %c0_i32_1 = arith.constant 0 : i32
    return %c0_i32, %c0_i32_0 : i32, i32
  }
  func.func @transform_5(%arg0: i32) -> (i32, i32) {
    %c0_i32 = arith.constant 0 : i32
    %c0_i32_0 = arith.constant 0 : i32
    %c0_i32_1 = arith.constant 0 : i32
    return %c0_i32, %c0_i32_0 : i32, i32
  }
  func.func @transform_6(%arg0: i32) -> (i32, i32) {
    %c0_i32 = arith.constant 0 : i32
    %c0_i32_0 = arith.constant 0 : i32
    %c0_i32_1 = arith.constant 0 : i32
    return %c0_i32, %c0_i32_0 : i32, i32
  }
  func.func @transform_7(%arg0: i32) -> (i32, i32) {
    %c0_i32 = arith.constant 0 : i32
    %c0_i32_0 = arith.constant 0 : i32
    %c0_i32_1 = arith.constant 0 : i32
    return %c0_i32, %c0_i32_0 : i32, i32
  }
  func.func @transform_8(%arg0: i32) -> (i32, i32) {
    %c0_i32 = arith.constant 0 : i32
    %c0_i32_0 = arith.constant 0 : i32
    return %arg0, %c0_i32 : i32, i32
  }
}

</mosaic_0001>

<llo_original>
// kernel: tpu_custom_call.1
$region0: #{tpu_custom_call.1}
  #allocation0 [shape = 'u32[]', space=smem, size = 0x4, offset = 0x4, fixed_abs, tag = 'smem constant byte address 0x4 - core index']
  #allocation1 [shape = 'u32[144,128]{1,0:T(1,128)}', space=vmem, size = 0x12000, scoped, tag = 'internal scratch']
  #allocation2 [shape = 'f32[1,1]{1,0:T(1,128)S(1)}', space=vmem, size = 0x200, scoped, tag = 'scoped memory for tpu_custom_call.1']
  %s0 = inlined_call_operand.vmem [shape: f32[35,128], index: 0, kind: input, shape index: {}]
  %s1 = inlined_call_operand.vmem [shape: bf16[128,32], index: 1, kind: input, shape index: {}]
  %s2 = inlined_call_operand.vmem [shape: bf16[128,128], index: 2, kind: input, shape index: {}]
  %s3 = inlined_call_operand.vmem [shape: f32[128,1], index: 3, kind: input, shape index: {}]
  %s4 = inlined_call_operand.vmem [shape: bf16[128,128], index: 4, kind: input, shape index: {}]
  %s5 = inlined_call_operand.vmem [shape: f32[128,1], index: 5, kind: input, shape index: {}]
  %s6 = inlined_call_operand.vmem [shape: bf16[1,128], index: 6, kind: input, shape index: {}]
  %s7 = inlined_call_operand.<no memory space> [shape: f32[1,1], index: 7, kind: input, shape index: {}]
  %s8 = inlined_call_operand.hbm [shape: f32[1,128], index: 8, kind: output, shape index: {}]
  %s9 = sld [smem:[#allocation0]]
  $region42: #{tpu_custom_call.1} parent=0
    _
  %s11 = ssub.s32 1, %s9
  %s12 = scalar_select 0, %s11, %s9
  %v13 = vstv %s7
  %14 = vst [vmem:[#allocation2] sm:$0x1] %v13
  $region1: #{tpu_custom_call.1} parent=0
    #allocation3 [shape = 'u8[512]{0}', space=vmem, size = 0x400, scoped, tag = 'output window, operand 0, single buffered']
    #allocation4 [shape = 's32[1]{0}', space=sflag, size = 0x4, scoped, tag = 'scoped memory for tpu_custom_call.1']
    %15 = vsyncpa [#allocation4], 0
    // Predicated region
    $region2: #{tpu_custom_call.1} parent=1 // pred_check
      _
    $region3: #{tpu_custom_call.1} parent=1 // pred_check_branch
      %17 = sbr.rel (0) target = $region5
    $region4: #{tpu_custom_call.1} parent=1 // pred_region
      _
    $region5: #{tpu_custom_call.1} parent=1 // pred_fallthru
      _
    // Predicated region
    $region6: #{tpu_custom_call.1} parent=1 // pred_check
      _
    $region7: #{tpu_custom_call.1} parent=1 // pred_check_branch
      %19 = sbr.rel (0) target = $region9
    $region8: #{tpu_custom_call.1} parent=1 // pred_region
      _
    $region9: #{tpu_custom_call.1} parent=1 // pred_fallthru
      _
    // Predicated region
    $region10: #{tpu_custom_call.1} parent=1 // pred_check
      _
    $region11: #{tpu_custom_call.1} parent=1 // pred_check_branch
      %21 = sbr.rel (0) target = $region13
    $region12: #{tpu_custom_call.1} parent=1 // pred_region
      _
    $region13: #{tpu_custom_call.1} parent=1 // pred_fallthru
      _
    // Predicated region
    $region14: #{tpu_custom_call.1} parent=1 // pred_check
      _
    $region15: #{tpu_custom_call.1} parent=1 // pred_check_branch
      %23 = sbr.rel (0) target = $region17
    $region16: #{tpu_custom_call.1} parent=1 // pred_region
      _
    $region17: #{tpu_custom_call.1} parent=1 // pred_fallthru
      _
    // Predicated region
    $region18: #{tpu_custom_call.1} parent=1 // pred_check
      _
    $region19: #{tpu_custom_call.1} parent=1 // pred_check_branch
      %25 = sbr.rel (0) target = $region21
    $region20: #{tpu_custom_call.1} parent=1 // pred_region
      _
    $region21: #{tpu_custom_call.1} parent=1 // pred_fallthru
      _
    // Predicated region
    $region22: #{tpu_custom_call.1} parent=1 // pred_check
      _
    $region23: #{tpu_custom_call.1} parent=1 // pred_check_branch
      %27 = sbr.rel (0) target = $region25
    $region24: #{tpu_custom_call.1} parent=1 // pred_region
      _
    $region25: #{tpu_custom_call.1} parent=1 // pred_fallthru
      _
    // Predicated region
    $region26: #{tpu_custom_call.1} parent=1 // pred_check
      _
    $region27: #{tpu_custom_call.1} parent=1 // pred_check_branch
      %29 = sbr.rel (0) target = $region29
    $region28: #{tpu_custom_call.1} parent=1 // pred_region
      _
    $region29: #{tpu_custom_call.1} parent=1 // pred_fallthru
      _
    // Predicated region
    $region30: #{tpu_custom_call.1} parent=1 // pred_check
      _
    $region31: #{tpu_custom_call.1} parent=1 // pred_check_branch
      %31 = sbr.rel (0) target = $region33
    $region32: #{tpu_custom_call.1} parent=1 // pred_region
      _
    $region33: #{tpu_custom_call.1} parent=1 // pred_fallthru
      _
    %v33 = vld [vmem:[%s1] sm:$0xf]
    %v34 = vld [vmem:[%s1 + $0x4] sm:$0xf]
    %v35 = vld [vmem:[%s1 + $0x8] sm:$0xf]
    %v36 = vld [vmem:[%s1 + $0xc] sm:$0xf]
    %v37 = vld [vmem:[%s1 + $0x10] sm:$0xf]
    %v38 = vld [vmem:[%s1 + $0x14] sm:$0xf]
    %v39 = vld [vmem:[%s1 + $0x18] sm:$0xf]
    %v40 = vld [vmem:[%s1 + $0x1c] sm:$0xf]
    %v41 = vld [vmem:[%s1 + $0x20] sm:$0xf]
    %v42 = vld [vmem:[%s1 + $0x24] sm:$0xf]
    %v43 = vld [vmem:[%s1 + $0x28] sm:$0xf]
    %v44 = vld [vmem:[%s1 + $0x2c] sm:$0xf]
    %v45 = vld [vmem:[%s1 + $0x30] sm:$0xf]
    %v46 = vld [vmem:[%s1 + $0x34] sm:$0xf]
    %v47 = vld [vmem:[%s1 + $0x38] sm:$0xf]
    %v48 = vld [vmem:[%s1 + $0x3c] sm:$0xf]
    %v49 = vld [vmem:[%s2] sm:$0xf]
    %v50 = vld [vmem:[%s2 + $0x4] sm:$0xf]
    %v51 = vld [vmem:[%s2 + $0x8] sm:$0xf]
    %v52 = vld [vmem:[%s2 + $0xc] sm:$0xf]
    %v53 = vld [vmem:[%s2 + $0x10] sm:$0xf]
    %v54 = vld [vmem:[%s2 + $0x14] sm:$0xf]
    %v55 = vld [vmem:[%s2 + $0x18] sm:$0xf]
    %v56 = vld [vmem:[%s2 + $0x1c] sm:$0xf]
    %v57 = vld [vmem:[%s2 + $0x20] sm:$0xf]
    %v58 = vld [vmem:[%s2 + $0x24] sm:$0xf]
    %v59 = vld [vmem:[%s2 + $0x28] sm:$0xf]
    %v60 = vld [vmem:[%s2 + $0x2c] sm:$0xf]
    %v61 = vld [vmem:[%s2 + $0x30] sm:$0xf]
    %v62 = vld [vmem:[%s2 + $0x34] sm:$0xf]
    %v63 = vld [vmem:[%s2 + $0x38] sm:$0xf]
    %v64 = vld [vmem:[%s2 + $0x3c] sm:$0xf]
    %v65 = vld [vmem:[%s3] sm:$0xff]
    %v66 = vld [vmem:[%s3 + $0x8] sm:$0xff]
    %v67 = vld [vmem:[%s3 + $0x10] sm:$0xff]
    %v68 = vld [vmem:[%s3 + $0x18] sm:$0xff]
    %v69 = vld [vmem:[%s3 + $0x20] sm:$0xff]
    %v70 = vld [vmem:[%s3 + $0x28] sm:$0xff]
    %v71 = vld [vmem:[%s3 + $0x30] sm:$0xff]
    %v72 = vld [vmem:[%s3 + $0x38] sm:$0xff]
    %v73 = vld [vmem:[%s3 + $0x40] sm:$0xff]
    %v74 = vld [vmem:[%s3 + $0x48] sm:$0xff]
    %v75 = vld [vmem:[%s3 + $0x50] sm:$0xff]
    %v76 = vld [vmem:[%s3 + $0x58] sm:$0xff]
    %v77 = vld [vmem:[%s3 + $0x60] sm:$0xff]
    %v78 = vld [vmem:[%s3 + $0x68] sm:$0xff]
    %v79 = vld [vmem:[%s3 + $0x70] sm:$0xff]
    %v80 = vld [vmem:[%s3 + $0x78] sm:$0xff]
    %v81 = vld [vmem:[%s4] sm:$0xf]
    %v82 = vld [vmem:[%s4 + $0x4] sm:$0xf]
    %v83 = vld [vmem:[%s4 + $0x8] sm:$0xf]
    %v84 = vld [vmem:[%s4 + $0xc] sm:$0xf]
    %v85 = vld [vmem:[%s4 + $0x10] sm:$0xf]
    %v86 = vld [vmem:[%s4 + $0x14] sm:$0xf]
    %v87 = vld [vmem:[%s4 + $0x18] sm:$0xf]
    %v88 = vld [vmem:[%s4 + $0x1c] sm:$0xf]
    %v89 = vld [vmem:[%s4 + $0x20] sm:$0xf]
    %v90 = vld [vmem:[%s4 + $0x24] sm:$0xf]
    %v91 = vld [vmem:[%s4 + $0x28] sm:$0xf]
    %v92 = vld [vmem:[%s4 + $0x2c] sm:$0xf]
    %v93 = vld [vmem:[%s4 + $0x30] sm:$0xf]
    %v94 = vld [vmem:[%s4 + $0x34] sm:$0xf]
    %v95 = vld [vmem:[%s4 + $0x38] sm:$0xf]
    %v96 = vld [vmem:[%s4 + $0x3c] sm:$0xf]
    %v97 = vld [vmem:[%s5] sm:$0xff]
    %v98 = vld [vmem:[%s5 + $0x8] sm:$0xff]
    %v99 = vld [vmem:[%s5 + $0x10] sm:$0xff]
    %v100 = vld [vmem:[%s5 + $0x18] sm:$0xff]
    %v101 = vld [vmem:[%s5 + $0x20] sm:$0xff]
    %v102 = vld [vmem:[%s5 + $0x28] sm:$0xff]
    %v103 = vld [vmem:[%s5 + $0x30] sm:$0xff]
    %v104 = vld [vmem:[%s5 + $0x38] sm:$0xff]
    %v105 = vld [vmem:[%s5 + $0x40] sm:$0xff]
    %v106 = vld [vmem:[%s5 + $0x48] sm:$0xff]
    %v107 = vld [vmem:[%s5 + $0x50] sm:$0xff]
    %v108 = vld [vmem:[%s5 + $0x58] sm:$0xff]
    %v109 = vld [vmem:[%s5 + $0x60] sm:$0xff]
    %v110 = vld [vmem:[%s5 + $0x68] sm:$0xff]
    %v111 = vld [vmem:[%s5 + $0x70] sm:$0xff]
    %v112 = vld [vmem:[%s5 + $0x78] sm:$0xff]
    %v113 = vld [vmem:[%s6] sm:$0x1]
    %v114 = vld [vmem:[#allocation2] sm:$0x1]
    %v115 = vld [vmem:[%s0] sm:$0xff]
    %v116 = vld [vmem:[%s0 + $0x8] sm:$0xff]
    %v117 = vld [vmem:[%s0 + $0x10] sm:$0xff]
    %v118 = vld [vmem:[%s0 + $0x18] sm:$0xff]
    %v119 = vld [vmem:[%s0 + $0x20] sm:$0x7]
    %v120 = vand.u32 2147483647, %v115
    %v121 = vand.u32 2147483647, %v116
    %v122 = vand.u32 2147483647, %v117
    %v123 = vand.u32 2147483647, %v118
    %v124 = vand.u32 2147483647, %v119
    %vm125 = vcmask 1042432
    %v126 = vsel %vm125, %v124, -inf
    %v127 = vmax.f32 %v120, %v126
    %v128 = vmax.f32 %v127, %v121
    %v129 = vmax.f32 %v122, %v123
    %v130 = vmax.f32 %v128, %v129
    %v131 = vrot.slane %v130, 4
    %v132 = vmax.f32 %v130, %v131
    %v133 = vrot.slane %v132, 2
    %v134 = vmax.f32 %v132, %v133
    %v135 = vrot.slane %v134, 1
    %v136 = vmax.f32 %v134, %v135
    %vm137 = vcmp.gt.f32.partialorder %v136, 1.0
    %v138 = vpack.c.bf16 %v116, %v115
    %v139 = vpack.c.bf16 %v118, %v117
    %v156 = vunpack.c.l.b16 %v33
    %v157 = vunpack.c.l.b16 %v34
    %v158 = vunpack.c.l.b16 %v35
    %v159 = vunpack.c.l.b16 %v36
    %v160 = vunpack.c.l.b16 %v37
    %v161 = vunpack.c.l.b16 %v38
    %v162 = vunpack.c.l.b16 %v39
    %v163 = vunpack.c.l.b16 %v40
    %v164 = vunpack.c.l.b16 %v41
    %v165 = vunpack.c.l.b16 %v42
    %v166 = vunpack.c.l.b16 %v43
    %v167 = vunpack.c.l.b16 %v44
    %v168 = vunpack.c.l.b16 %v45
    %v169 = vunpack.c.l.b16 %v46
    %v170 = vunpack.c.l.b16 %v47
    %v171 = vunpack.c.l.b16 %v48
    %v172 = vpack.c.b16 %v157, %v156
    %v173 = vpack.c.b16 %v159, %v158
    %v174 = vpack.c.b16 %v161, %v160
    %v175 = vpack.c.b16 %v163, %v162
    %v176 = vpack.c.b16 %v165, %v164
    %v177 = vpack.c.b16 %v167, %v166
    %v178 = vpack.c.b16 %v169, %v168
    %v179 = vpack.c.b16 %v171, %v170
    %vm180 = vcmask 261120
    %v182 = vsel %vm180, %v172, 0
    %v185 = vsel %vm180, %v173, 0
    %v188 = vsel %vm180, %v174, 0
    %v191 = vsel %vm180, %v175, 0
    %v194 = vsel %vm180, %v176, 0
    %v197 = vsel %vm180, %v177, 0
    %v200 = vsel %vm180, %v178, 0
    %v203 = vsel %vm180, %v179, 0
    %205 = vmatprep.subr.bf16.mxu0 0
    %206 = vmatpush1.bf16.msra.mxu0 %v138
    %207 = vmatprep.subr.bf16.mxu0 0
    %208 = vmatpush1.bf16.msra.mxu0 %v139
    %209 = vmatprep.subr.bf16.mxu0 0
    %210 = vmatpush1.bf16.msra.mxu0 0
    %211 = vmatprep.subr.bf16.mxu0 0
    %212 = vmatpush1.bf16.msra.mxu0 0
    %213 = vmatprep.subr.bf16.mxu0 0
    %214 = vmatpush1.bf16.msra.mxu0 0
    %215 = vmatprep.subr.bf16.mxu0 0
    %216 = vmatpush1.bf16.msra.mxu0 0
    %217 = vmatprep.subr.bf16.mxu0 0
    %218 = vmatpush1.bf16.msra.mxu0 0
    %219 = vmatprep.subr.bf16.mxu0 0
    %220 = vmatpush1.bf16.msra.mxu0 0
    %221 = vmatprep.subr.bf16.mxu0 0
    %222 = vmatpush1.bf16.msra.mxu0 0
    %223 = vmatprep.subr.bf16.mxu0 0
    %224 = vmatpush1.bf16.msra.mxu0 0
    %225 = vmatprep.subr.bf16.mxu0 0
    %226 = vmatpush1.bf16.msra.mxu0 0
    %227 = vmatprep.subr.bf16.mxu0 0
    %228 = vmatpush1.bf16.msra.mxu0 0
    %229 = vmatprep.subr.bf16.mxu0 0
    %230 = vmatpush1.bf16.msra.mxu0 0
    %231 = vmatprep.subr.bf16.mxu0 0
    %232 = vmatpush1.bf16.msra.mxu0 0
    %233 = vmatprep.subr.bf16.mxu0 0
    %234 = vmatpush1.bf16.msra.mxu0 0
    %235 = vmatprep.subr.bf16.mxu0 0
    %236 = vmatpush1.bf16.msra.mxu0 0
    %237 = vmatprep.mubr.bf16.mxu0 0
    %238 = vmatmul.mubr.bf16.gmra.mrb[0].mxu0 %v182
    %v239 = vpop.f32.mrb[0].mxu0
    %v240 = vadd.f32 0.0, %v239
    %v241 = vpop.f32.mrb[0].mxu0
    %v242 = vpop.f32.mrb[0].mxu0
    %v243 = vadd.f32 0.0, %v242
    %v244 = vpop.f32.mrb[0].mxu0
    %245 = vmatprep.mubr.bf16.mxu0 0
    %246 = vmatmul.mubr.bf16.gmra.mrb[0].mxu0 %v185
    %v247 = vpop.f32.mrb[0].mxu0
    %v248 = vadd.f32 0.0, %v247
    %v249 = vpop.f32.mrb[0].mxu0
    %v250 = vpop.f32.mrb[0].mxu0
    %v251 = vadd.f32 0.0, %v250
    %v252 = vpop.f32.mrb[0].mxu0
    %253 = vmatprep.mubr.bf16.mxu0 0
    %254 = vmatmul.mubr.bf16.gmra.mrb[0].mxu0 %v188
    %v255 = vpop.f32.mrb[0].mxu0
    %v256 = vadd.f32 0.0, %v255
    %v257 = vpop.f32.mrb[0].mxu0
    %v258 = vpop.f32.mrb[0].mxu0
    %v259 = vadd.f32 0.0, %v258
    %v260 = vpop.f32.mrb[0].mxu0
    %261 = vmatprep.mubr.bf16.mxu0 0
    %262 = vmatmul.mubr.bf16.gmra.mrb[0].mxu0 %v191
    %v263 = vpop.f32.mrb[0].mxu0
    %v264 = vadd.f32 0.0, %v263
    %v265 = vpop.f32.mrb[0].mxu0
    %v266 = vpop.f32.mrb[0].mxu0
    %v267 = vadd.f32 0.0, %v266
    %v268 = vpop.f32.mrb[0].mxu0
    %269 = vmatprep.mubr.bf16.mxu0 0
    %270 = vmatmul.mubr.bf16.gmra.mrb[0].mxu0 %v194
    %v271 = vpop.f32.mrb[0].mxu0
    %v272 = vadd.f32 0.0, %v271
    %v273 = vpop.f32.mrb[0].mxu0
    %v274 = vpop.f32.mrb[0].mxu0
    %v275 = vadd.f32 0.0, %v274
    %v276 = vpop.f32.mrb[0].mxu0
    %277 = vmatprep.mubr.bf16.mxu0 0
    %278 = vmatmul.mubr.bf16.gmra.mrb[0].mxu0 %v197
    %v279 = vpop.f32.mrb[0].mxu0
    %v280 = vadd.f32 0.0, %v279
    %v281 = vpop.f32.mrb[0].mxu0
    %v282 = vpop.f32.mrb[0].mxu0
    %v283 = vadd.f32 0.0, %v282
    %v284 = vpop.f32.mrb[0].mxu0
    %285 = vmatprep.mubr.bf16.mxu0 0
    %286 = vmatmul.mubr.bf16.gmra.mrb[0].mxu0 %v200
    %v287 = vpop.f32.mrb[0].mxu0
    %v288 = vadd.f32 0.0, %v287
    %v289 = vpop.f32.mrb[0].mxu0
    %v290 = vpop.f32.mrb[0].mxu0
    %v291 = vadd.f32 0.0, %v290
    %v292 = vpop.f32.mrb[0].mxu0
    %293 = vmatprep.mubr.bf16.mxu0 0
    %294 = vmatmul.mubr.bf16.gmra.mrb[0].mxu0 %v203
    %v295 = vpop.f32.mrb[0].mxu0
    %v296 = vadd.f32 0.0, %v295
    %v297 = vpop.f32.mrb[0].mxu0
    %v298 = vpop.f32.mrb[0].mxu0
    %v299 = vadd.f32 0.0, %v298
    %v300 = vpop.f32.mrb[0].mxu0
    %301 = vdwg.mxu0
    %v302 = vmax.f32 %v240, 0.0
    %v303 = vmax.f32 %v243, 0.0
    %v304 = vmax.f32 %v248, 0.0
    %v305 = vmax.f32 %v251, 0.0
    %v306 = vmax.f32 %v256, 0.0
    %v307 = vmax.f32 %v259, 0.0
    %v308 = vmax.f32 %v264, 0.0
    %v309 = vmax.f32 %v267, 0.0
    %v310 = vmax.f32 %v272, 0.0
    %v311 = vmax.f32 %v275, 0.0
    %v312 = vmax.f32 %v280, 0.0
    %v313 = vmax.f32 %v283, 0.0
    %v314 = vmax.f32 %v288, 0.0
    %v315 = vmax.f32 %v291, 0.0
    %v316 = vmax.f32 %v296, 0.0
    %v317 = vmax.f32 %v299, 0.0
    %v318 = vpack.c.bf16 %v303, %v302
    %v319 = vpack.c.bf16 %v305, %v304
    %v320 = vpack.c.bf16 %v307, %v306
    %v321 = vpack.c.bf16 %v309, %v308
    %v322 = vpack.c.bf16 %v311, %v310
    %v323 = vpack.c.bf16 %v313, %v312
    %v324 = vpack.c.bf16 %v315, %v314
    %v325 = vpack.c.bf16 %v317, %v316
    %327 = vset.pattern.permute.xlu0 0
    %328 = vperm.xlu0 %327, %v65
    %v329 = vpop.permute.xlu0 %328
    %332 = vset.pattern.permute.xlu0 0
    %333 = vperm.xlu0 %332, %v66
    %v334 = vpop.permute.xlu0 %333
    %337 = vset.pattern.permute.xlu0 0
    %338 = vperm.xlu0 %337, %v67
    %v339 = vpop.permute.xlu0 %338
    %342 = vset.pattern.permute.xlu0 0
    %343 = vperm.xlu0 %342, %v68
    %v344 = vpop.permute.xlu0 %343
    %347 = vset.pattern.permute.xlu0 0
    %348 = vperm.xlu0 %347, %v69
    %v349 = vpop.permute.xlu0 %348
    %352 = vset.pattern.permute.xlu0 0
    %353 = vperm.xlu0 %352, %v70
    %v354 = vpop.permute.xlu0 %353
    %357 = vset.pattern.permute.xlu0 0
    %358 = vperm.xlu0 %357, %v71
    %v359 = vpop.permute.xlu0 %358
    %362 = vset.pattern.permute.xlu0 0
    %363 = vperm.xlu0 %362, %v72
    %v364 = vpop.permute.xlu0 %363
    %367 = vset.pattern.permute.xlu0 0
    %368 = vperm.xlu0 %367, %v73
    %v369 = vpop.permute.xlu0 %368
    %372 = vset.pattern.permute.xlu0 0
    %373 = vperm.xlu0 %372, %v74
    %v374 = vpop.permute.xlu0 %373
    %377 = vset.pattern.permute.xlu0 0
    %378 = vperm.xlu0 %377, %v75
    %v379 = vpop.permute.xlu0 %378
    %382 = vset.pattern.permute.xlu0 0
    %383 = vperm.xlu0 %382, %v76
    %v384 = vpop.permute.xlu0 %383
    %387 = vset.pattern.permute.xlu0 0
    %388 = vperm.xlu0 %387, %v77
    %v389 = vpop.permute.xlu0 %388
    %392 = vset.pattern.permute.xlu0 0
    %393 = vperm.xlu0 %392, %v78
    %v394 = vpop.permute.xlu0 %393
    %397 = vset.pattern.permute.xlu0 0
    %398 = vperm.xlu0 %397, %v79
    %v399 = vpop.permute.xlu0 %398
    %402 = vset.pattern.permute.xlu0 0
    %403 = vperm.xlu0 %402, %v80
    %v404 = vpop.permute.xlu0 %403
    %v422 = vunpack.c.l.b16 %v49
    %v423 = vunpack.c.l.b16 %v50
    %v424 = vunpack.c.l.b16 %v51
    %v425 = vunpack.c.l.b16 %v52
    %v426 = vunpack.c.l.b16 %v53
    %v427 = vunpack.c.l.b16 %v54
    %v428 = vunpack.c.l.b16 %v55
    %v429 = vunpack.c.l.b16 %v56
    %v430 = vunpack.c.l.b16 %v57
    %v431 = vunpack.c.l.b16 %v58
    %v432 = vunpack.c.l.b16 %v59
    %v433 = vunpack.c.l.b16 %v60
    %v434 = vunpack.c.l.b16 %v61
    %v435 = vunpack.c.l.b16 %v62
    %v436 = vunpack.c.l.b16 %v63
    %v437 = vunpack.c.l.b16 %v64
    %v438 = vpack.c.b16 %v423, %v422
    %v439 = vpack.c.b16 %v425, %v424
    %v440 = vpack.c.b16 %v427, %v426
    %v441 = vpack.c.b16 %v429, %v428
    %v442 = vpack.c.b16 %v431, %v430
    %v443 = vpack.c.b16 %v433, %v432
    %v444 = vpack.c.b16 %v435, %v434
    %v445 = vpack.c.b16 %v437, %v436
    %454 = vmatprep.subr.bf16.mxu0 0
    %455 = vmatpush1.bf16.msra.mxu0 %v318
    %456 = vmatprep.subr.bf16.mxu0 0
    %457 = vmatpush1.bf16.msra.mxu0 %v319
    %458 = vmatprep.subr.bf16.mxu0 0
    %459 = vmatpush1.bf16.msra.mxu0 %v320
    %460 = vmatprep.subr.bf16.mxu0 0
    %461 = vmatpush1.bf16.msra.mxu0 %v321
    %462 = vmatprep.subr.bf16.mxu0 0
    %463 = vmatpush1.bf16.msra.mxu0 %v322
    %464 = vmatprep.subr.bf16.mxu0 0
    %465 = vmatpush1.bf16.msra.mxu0 %v323
    %466 = vmatprep.subr.bf16.mxu0 0
    %467 = vmatpush1.bf16.msra.mxu0 %v324
    %468 = vmatprep.subr.bf16.mxu0 0
    %469 = vmatpush1.bf16.msra.mxu0 %v325
    %470 = vmatprep.subr.bf16.mxu0 0
    %471 = vmatpush1.bf16.msra.mxu0 0
    %472 = vmatprep.subr.bf16.mxu0 0
    %473 = vmatpush1.bf16.msra.mxu0 0
    %474 = vmatprep.subr.bf16.mxu0 0
    %475 = vmatpush1.bf16.msra.mxu0 0
    %476 = vmatprep.subr.bf16.mxu0 0
    %477 = vmatpush1.bf16.msra.mxu0 0
    %478 = vmatprep.subr.bf16.mxu0 0
    %479 = vmatpush1.bf16.msra.mxu0 0
    %480 = vmatprep.subr.bf16.mxu0 0
    %481 = vmatpush1.bf16.msra.mxu0 0
    %482 = vmatprep.subr.bf16.mxu0 0
    %483 = vmatpush1.bf16.msra.mxu0 0
    %484 = vmatprep.subr.bf16.mxu0 0
    %485 = vmatpush1.bf16.msra.mxu0 0
    %486 = vmatprep.mubr.bf16.mxu0 0
    %487 = vmatmul.mubr.bf16.gmra.mrb[0].mxu0 %v438
    %v488 = vpop.f32.mrb[0].mxu0
    %v489 = vadd.f32 %v329, %v488
    %v490 = vpop.f32.mrb[0].mxu0
    %v491 = vpop.f32.mrb[0].mxu0
    %v492 = vadd.f32 %v334, %v491
    %v493 = vpop.f32.mrb[0].mxu0
    %494 = vmatprep.mubr.bf16.mxu0 0
    %495 = vmatmul.mubr.bf16.gmra.mrb[0].mxu0 %v439
    %v496 = vpop.f32.mrb[0].mxu0
    %v497 = vadd.f32 %v339, %v496
    %v498 = vpop.f32.mrb[0].mxu0
    %v499 = vpop.f32.mrb[0].mxu0
    %v500 = vadd.f32 %v344, %v499
    %v501 = vpop.f32.mrb[0].mxu0
    %502 = vmatprep.mubr.bf16.mxu0 0
    %503 = vmatmul.mubr.bf16.gmra.mrb[0].mxu0 %v440
    %v504 = vpop.f32.mrb[0].mxu0
    %v505 = vadd.f32 %v349, %v504
    %v506 = vpop.f32.mrb[0].mxu0
    %v507 = vpop.f32.mrb[0].mxu0
    %v508 = vadd.f32 %v354, %v507
    %v509 = vpop.f32.mrb[0].mxu0
    %510 = vmatprep.mubr.bf16.mxu0 0
    %511 = vmatmul.mubr.bf16.gmra.mrb[0].mxu0 %v441
    %v512 = vpop.f32.mrb[0].mxu0
    %v513 = vadd.f32 %v359, %v512
    %v514 = vpop.f32.mrb[0].mxu0
    %v515 = vpop.f32.mrb[0].mxu0
    %v516 = vadd.f32 %v364, %v515
    %v517 = vpop.f32.mrb[0].mxu0
    %518 = vmatprep.mubr.bf16.mxu0 0
    %519 = vmatmul.mubr.bf16.gmra.mrb[0].mxu0 %v442
    %v520 = vpop.f32.mrb[0].mxu0
    %v521 = vadd.f32 %v369, %v520
    %v522 = vpop.f32.mrb[0].mxu0
    %v523 = vpop.f32.mrb[0].mxu0
    %v524 = vadd.f32 %v374, %v523
    %v525 = vpop.f32.mrb[0].mxu0
    %526 = vmatprep.mubr.bf16.mxu0 0
    %527 = vmatmul.mubr.bf16.gmra.mrb[0].mxu0 %v443
    %v528 = vpop.f32.mrb[0].mxu0
    %v529 = vadd.f32 %v379, %v528
    %v530 = vpop.f32.mrb[0].mxu0
    %v531 = vpop.f32.mrb[0].mxu0
    %v532 = vadd.f32 %v384, %v531
    %v533 = vpop.f32.mrb[0].mxu0
    %534 = vmatprep.mubr.bf16.mxu0 0
    %535 = vmatmul.mubr.bf16.gmra.mrb[0].mxu0 %v444
    %v536 = vpop.f32.mrb[0].mxu0
    %v537 = vadd.f32 %v389, %v536
    %v538 = vpop.f32.mrb[0].mxu0
    %v539 = vpop.f32.mrb[0].mxu0
    %v540 = vadd.f32 %v394, %v539
    %v541 = vpop.f32.mrb[0].mxu0
    %542 = vmatprep.mubr.bf16.mxu0 0
    %543 = vmatmul.mubr.bf16.gmra.mrb[0].mxu0 %v445
    %v544 = vpop.f32.mrb[0].mxu0
    %v545 = vadd.f32 %v399, %v544
    %v546 = vpop.f32.mrb[0].mxu0
    %v547 = vpop.f32.mrb[0].mxu0
    %v548 = vadd.f32 %v404, %v547
    %v549 = vpop.f32.mrb[0].mxu0
    %550 = vdwg.mxu0
    %v551 = vmax.f32 %v489, 0.0
    %v552 = vmax.f32 %v492, 0.0
    %v553 = vmax.f32 %v497, 0.0
    %v554 = vmax.f32 %v500, 0.0
    %v555 = vmax.f32 %v505, 0.0
    %v556 = vmax.f32 %v508, 0.0
    %v557 = vmax.f32 %v513, 0.0
    %v558 = vmax.f32 %v516, 0.0
    %v559 = vmax.f32 %v521, 0.0
    %v560 = vmax.f32 %v524, 0.0
    %v561 = vmax.f32 %v529, 0.0
    %v562 = vmax.f32 %v532, 0.0
    %v563 = vmax.f32 %v537, 0.0
    %v564 = vmax.f32 %v540, 0.0
    %v565 = vmax.f32 %v545, 0.0
    %v566 = vmax.f32 %v548, 0.0
    %v567 = vpack.c.bf16 %v552, %v551
    %v568 = vpack.c.bf16 %v554, %v553
    %v569 = vpack.c.bf16 %v556, %v555
    %v570 = vpack.c.bf16 %v558, %v557
    %v571 = vpack.c.bf16 %v560, %v559
    %v572 = vpack.c.bf16 %v562, %v561
    %v573 = vpack.c.bf16 %v564, %v563
    %v574 = vpack.c.bf16 %v566, %v565
    %576 = vset.pattern.permute.xlu0 0
    %577 = vperm.xlu0 %576, %v97
    %v578 = vpop.permute.xlu0 %577
    %581 = vset.pattern.permute.xlu0 0
    %582 = vperm.xlu0 %581, %v98
    %v583 = vpop.permute.xlu0 %582
    %586 = vset.pattern.permute.xlu0 0
    %587 = vperm.xlu0 %586, %v99
    %v588 = vpop.permute.xlu0 %587
    %591 = vset.pattern.permute.xlu0 0
    %592 = vperm.xlu0 %591, %v100
    %v593 = vpop.permute.xlu0 %592
    %596 = vset.pattern.permute.xlu0 0
    %597 = vperm.xlu0 %596, %v101
    %v598 = vpop.permute.xlu0 %597
    %601 = vset.pattern.permute.xlu0 0
    %602 = vperm.xlu0 %601, %v102
    %v603 = vpop.permute.xlu0 %602
    %606 = vset.pattern.permute.xlu0 0
    %607 = vperm.xlu0 %606, %v103
    %v608 = vpop.permute.xlu0 %607
    %611 = vset.pattern.permute.xlu0 0
    %612 = vperm.xlu0 %611, %v104
    %v613 = vpop.permute.xlu0 %612
    %616 = vset.pattern.permute.xlu0 0
    %617 = vperm.xlu0 %616, %v105
    %v618 = vpop.permute.xlu0 %617
    %621 = vset.pattern.permute.xlu0 0
    %622 = vperm.xlu0 %621, %v106
    %v623 = vpop.permute.xlu0 %622
    %626 = vset.pattern.permute.xlu0 0
    %627 = vperm.xlu0 %626, %v107
    %v628 = vpop.permute.xlu0 %627
    %631 = vset.pattern.permute.xlu0 0
    %632 = vperm.xlu0 %631, %v108
    %v633 = vpop.permute.xlu0 %632
    %636 = vset.pattern.permute.xlu0 0
    %637 = vperm.xlu0 %636, %v109
    %v638 = vpop.permute.xlu0 %637
    %641 = vset.pattern.permute.xlu0 0
    %642 = vperm.xlu0 %641, %v110
    %v643 = vpop.permute.xlu0 %642
    %646 = vset.pattern.permute.xlu0 0
    %647 = vperm.xlu0 %646, %v111
    %v648 = vpop.permute.xlu0 %647
    %651 = vset.pattern.permute.xlu0 0
    %652 = vperm.xlu0 %651, %v112
    %v653 = vpop.permute.xlu0 %652
    %v671 = vunpack.c.l.b16 %v81
    %v672 = vunpack.c.l.b16 %v82
    %v673 = vunpack.c.l.b16 %v83
    %v674 = vunpack.c.l.b16 %v84
    %v675 = vunpack.c.l.b16 %v85
    %v676 = vunpack.c.l.b16 %v86
    %v677 = vunpack.c.l.b16 %v87
    %v678 = vunpack.c.l.b16 %v88
    %v679 = vunpack.c.l.b16 %v89
    %v680 = vunpack.c.l.b16 %v90
    %v681 = vunpack.c.l.b16 %v91
    %v682 = vunpack.c.l.b16 %v92
    %v683 = vunpack.c.l.b16 %v93
    %v684 = vunpack.c.l.b16 %v94
    %v685 = vunpack.c.l.b16 %v95
    %v686 = vunpack.c.l.b16 %v96
    %v687 = vpack.c.b16 %v672, %v671
    %v688 = vpack.c.b16 %v674, %v673
    %v689 = vpack.c.b16 %v676, %v675
    %v690 = vpack.c.b16 %v678, %v677
    %v691 = vpack.c.b16 %v680, %v679
    %v692 = vpack.c.b16 %v682, %v681
    %v693 = vpack.c.b16 %v684, %v683
    %v694 = vpack.c.b16 %v686, %v685
    %703 = vmatprep.subr.bf16.mxu0 0
    %704 = vmatpush1.bf16.msra.mxu0 %v567
    %705 = vmatprep.subr.bf16.mxu0 0
    %706 = vmatpush1.bf16.msra.mxu0 %v568
    %707 = vmatprep.subr.bf16.mxu0 0
    %708 = vmatpush1.bf16.msra.mxu0 %v569
    %709 = vmatprep.subr.bf16.mxu0 0
    %710 = vmatpush1.bf16.msra.mxu0 %v570
    %711 = vmatprep.subr.bf16.mxu0 0
    %712 = vmatpush1.bf16.msra.mxu0 %v571
    %713 = vmatprep.subr.bf16.mxu0 0
    %714 = vmatpush1.bf16.msra.mxu0 %v572
    %715 = vmatprep.subr.bf16.mxu0 0
    %716 = vmatpush1.bf16.msra.mxu0 %v573
    %717 = vmatprep.subr.bf16.mxu0 0
    %718 = vmatpush1.bf16.msra.mxu0 %v574
    %719 = vmatprep.subr.bf16.mxu0 0
    %720 = vmatpush1.bf16.msra.mxu0 0
    %721 = vmatprep.subr.bf16.mxu0 0
    %722 = vmatpush1.bf16.msra.mxu0 0
    %723 = vmatprep.subr.bf16.mxu0 0
    %724 = vmatpush1.bf16.msra.mxu0 0
    %725 = vmatprep.subr.bf16.mxu0 0
    %726 = vmatpush1.bf16.msra.mxu0 0
    %727 = vmatprep.subr.bf16.mxu0 0
    %728 = vmatpush1.bf16.msra.mxu0 0
    %729 = vmatprep.subr.bf16.mxu0 0
    %730 = vmatpush1.bf16.msra.mxu0 0
    %731 = vmatprep.subr.bf16.mxu0 0
    %732 = vmatpush1.bf16.msra.mxu0 0
    %733 = vmatprep.subr.bf16.mxu0 0
    %734 = vmatpush1.bf16.msra.mxu0 0
    %735 = vmatprep.mubr.bf16.mxu0 0
    %736 = vmatmul.mubr.bf16.gmra.mrb[0].mxu0 %v687
    %v737 = vpop.f32.mrb[0].mxu0
    %v738 = vadd.f32 %v578, %v737
    %v739 = vpop.f32.mrb[0].mxu0
    %v740 = vpop.f32.mrb[0].mxu0
    %v741 = vadd.f32 %v583, %v740
    %v742 = vpop.f32.mrb[0].mxu0
    %743 = vmatprep.mubr.bf16.mxu0 0
    %744 = vmatmul.mubr.bf16.gmra.mrb[0].mxu0 %v688
    %v745 = vpop.f32.mrb[0].mxu0
    %v746 = vadd.f32 %v588, %v745
    %v747 = vpop.f32.mrb[0].mxu0
    %v748 = vpop.f32.mrb[0].mxu0
    %v749 = vadd.f32 %v593, %v748
    %v750 = vpop.f32.mrb[0].mxu0
    %751 = vmatprep.mubr.bf16.mxu0 0
    %752 = vmatmul.mubr.bf16.gmra.mrb[0].mxu0 %v689
    %v753 = vpop.f32.mrb[0].mxu0
    %v754 = vadd.f32 %v598, %v753
    %v755 = vpop.f32.mrb[0].mxu0
    %v756 = vpop.f32.mrb[0].mxu0
    %v757 = vadd.f32 %v603, %v756
    %v758 = vpop.f32.mrb[0].mxu0
    %759 = vmatprep.mubr.bf16.mxu0 0
    %760 = vmatmul.mubr.bf16.gmra.mrb[0].mxu0 %v690
    %v761 = vpop.f32.mrb[0].mxu0
    %v762 = vadd.f32 %v608, %v761
    %v763 = vpop.f32.mrb[0].mxu0
    %v764 = vpop.f32.mrb[0].mxu0
    %v765 = vadd.f32 %v613, %v764
    %v766 = vpop.f32.mrb[0].mxu0
    %767 = vmatprep.mubr.bf16.mxu0 0
    %768 = vmatmul.mubr.bf16.gmra.mrb[0].mxu0 %v691
    %v769 = vpop.f32.mrb[0].mxu0
    %v770 = vadd.f32 %v618, %v769
    %v771 = vpop.f32.mrb[0].mxu0
    %v772 = vpop.f32.mrb[0].mxu0
    %v773 = vadd.f32 %v623, %v772
    %v774 = vpop.f32.mrb[0].mxu0
    %775 = vmatprep.mubr.bf16.mxu0 0
    %776 = vmatmul.mubr.bf16.gmra.mrb[0].mxu0 %v692
    %v777 = vpop.f32.mrb[0].mxu0
    %v778 = vadd.f32 %v628, %v777
    %v779 = vpop.f32.mrb[0].mxu0
    %v780 = vpop.f32.mrb[0].mxu0
    %v781 = vadd.f32 %v633, %v780
    %v782 = vpop.f32.mrb[0].mxu0
    %783 = vmatprep.mubr.bf16.mxu0 0
    %784 = vmatmul.mubr.bf16.gmra.mrb[0].mxu0 %v693
    %v785 = vpop.f32.mrb[0].mxu0
    %v786 = vadd.f32 %v638, %v785
    %v787 = vpop.f32.mrb[0].mxu0
    %v788 = vpop.f32.mrb[0].mxu0
    %v789 = vadd.f32 %v643, %v788
    %v790 = vpop.f32.mrb[0].mxu0
    %791 = vmatprep.mubr.bf16.mxu0 0
    %792 = vmatmul.mubr.bf16.gmra.mrb[0].mxu0 %v694
    %v793 = vpop.f32.mrb[0].mxu0
    %v794 = vadd.f32 %v648, %v793
    %v795 = vpop.f32.mrb[0].mxu0
    %v796 = vpop.f32.mrb[0].mxu0
    %v797 = vadd.f32 %v653, %v796
    %v798 = vpop.f32.mrb[0].mxu0
    %799 = vdwg.mxu0
    %v800 = vmax.f32 %v738, 0.0
    %v801 = vmax.f32 %v741, 0.0
    %v802 = vmax.f32 %v746, 0.0
    %v803 = vmax.f32 %v749, 0.0
    %v804 = vmax.f32 %v754, 0.0
    %v805 = vmax.f32 %v757, 0.0
    %v806 = vmax.f32 %v762, 0.0
    %v807 = vmax.f32 %v765, 0.0
    %v808 = vmax.f32 %v770, 0.0
    %v809 = vmax.f32 %v773, 0.0
    %v810 = vmax.f32 %v778, 0.0
    %v811 = vmax.f32 %v781, 0.0
    %v812 = vmax.f32 %v786, 0.0
    %v813 = vmax.f32 %v789, 0.0
    %v814 = vmax.f32 %v794, 0.0
    %v815 = vmax.f32 %v797, 0.0
    %v816 = vpack.c.bf16 %v801, %v800
    %v817 = vpack.c.bf16 %v803, %v802
    %v818 = vpack.c.bf16 %v805, %v804
    %v819 = vpack.c.bf16 %v807, %v806
    %v820 = vpack.c.bf16 %v809, %v808
    %v821 = vpack.c.bf16 %v811, %v810
    %v822 = vpack.c.bf16 %v813, %v812
    %v823 = vpack.c.bf16 %v815, %v814
    %825 = vset.pattern.permute.xlu0 0
    %826 = vperm.xlu0 %825, %v114
    %v827 = vpop.permute.xlu0 %826
    %v829 = vlaneseq
    %v830 = vshrl.u32 %v829, 7
    %v831 = vsub.s32 0, %v830
    %v832 = vrot.slane %v827, %v831
    %833 = vmatprep.subr.bf16.mxu0 0
    %834 = vmatpush1.bf16.msra.mxu0 %v816
    %835 = vmatprep.subr.bf16.mxu0 0
    %836 = vmatpush1.bf16.msra.mxu0 %v817
    %837 = vmatprep.subr.bf16.mxu0 0
    %838 = vmatpush1.bf16.msra.mxu0 %v818
    %839 = vmatprep.subr.bf16.mxu0 0
    %840 = vmatpush1.bf16.msra.mxu0 %v819
    %841 = vmatprep.subr.bf16.mxu0 0
    %842 = vmatpush1.bf16.msra.mxu0 %v820
    %843 = vmatprep.subr.bf16.mxu0 0
    %844 = vmatpush1.bf16.msra.mxu0 %v821
    %845 = vmatprep.subr.bf16.mxu0 0
    %846 = vmatpush1.bf16.msra.mxu0 %v822
    %847 = vmatprep.subr.bf16.mxu0 0
    %848 = vmatpush1.bf16.msra.mxu0 %v823
    %849 = vmatprep.subr.bf16.mxu0 0
    %850 = vmatpush1.bf16.msra.mxu0 0
    %851 = vmatprep.subr.bf16.mxu0 0
    %852 = vmatpush1.bf16.msra.mxu0 0
    %853 = vmatprep.subr.bf16.mxu0 0
    %854 = vmatpush1.bf16.msra.mxu0 0
    %855 = vmatprep.subr.bf16.mxu0 0
    %856 = vmatpush1.bf16.msra.mxu0 0
    %857 = vmatprep.subr.bf16.mxu0 0
    %858 = vmatpush1.bf16.msra.mxu0 0
    %859 = vmatprep.subr.bf16.mxu0 0
    %860 = vmatpush1.bf16.msra.mxu0 0
    %861 = vmatprep.subr.bf16.mxu0 0
    %862 = vmatpush1.bf16.msra.mxu0 0
    %863 = vmatprep.subr.bf16.mxu0 0
    %864 = vmatpush1.bf16.msra.mxu0 0
    %865 = vmatprep.mubr.bf16.mxu0 0
    %866 = vmatmul.mubr.bf16.gmra.mrb[0].mxu0 %v113
    %v867 = vpop.f32.mrb[0].mxu0
    %v868 = vadd.f32 %v832, %v867
    %v869 = vpop.f32.mrb[0].mxu0
    %v870 = vpop.f32.mrb[0].mxu0
    %v871 = vpop.f32.mrb[0].mxu0
    %872 = vdwg.mxu0
    %v873 = vxor.u32 %v868, 2147483648
    %v874 = vmul.f32 %v873, 1.442695
    %v875 = vpow.pop %v874
    %v876 = vadd.f32 %v875, 1.0
    %v877 = vrcp.pop %v876
    %v878 = vmul.f32 1.0, %v877
    %v879 = vsel %vm137, 0.0, %v878
    %880 = vst [vmem:[#allocation3] sm:$0x1] %v879
    // Predicated region
    $region34: #{tpu_custom_call.1} parent=1 // pred_check
      _
    $region35: #{tpu_custom_call.1} parent=1 // pred_check_branch
      %882 = sbr.rel (0) target = $region37
    $region36: #{tpu_custom_call.1} parent=1 // pred_region
      %s884 = ssub.s32 16, 16
      %885 = vsyncadd [#allocation4], %s884
      %s887 = sshll.u32 [#allocation3], 4
      %s888 = int_to_ptr.vmem [resolvable:$true] %s887
      %890 = dma.vmem_to_hbm [thread:$0]  %s888, 16, %s8, [#allocation4]
    $region37: #{tpu_custom_call.1} parent=1 // pred_fallthru
      _
    // Predicated region
    $region38: #{tpu_custom_call.1} parent=1 // pred_check
      _
    $region39: #{tpu_custom_call.1} parent=1 // pred_check_branch
      %892 = sbr.rel (0) target = $region41
    $region40: #{tpu_custom_call.1} parent=1 // pred_region
      %893 = dma.done [#allocation4], 16
    $region41: #{tpu_custom_call.1} parent=1 // pred_fallthru
      _
    %894 = vsyncpa [#allocation4], 1

</llo_original>
